<compile_context>
chip_gen: v7x
topology: tpu7x:2x2x1
jax: 0.10.0
libtpu: 0.0.40
codegen_flags: <defaults>
</compile_context>

<pallas_src>
import jax
import jax.numpy as jnp
from jax.experimental import pallas as pl
from jax.experimental.pallas import tpu as pltpu


def _model_kernel(xt_ref, w1_ref, b1_ref, w2_ref, b2_ref, ot_ref):
    # xt: [In, tb], w1: [H, In], b1: [H, 1], w2: [5, H], b2: [5, 1], ot: [5, tb]
    xt = xt_ref[...]

    # linear1 (batch-in-lanes): h^T = w1 @ x^T + b1
    h = jnp.dot(w1_ref[...], xt, preferred_element_type=jnp.float32) + b1_ref[...]

    # sigmoid via a single EUP tanh (no exp + full-precision divide chain)
    h = 0.5 * jnp.tanh(0.5 * h) + 0.5

    # softmax over the hidden axis (axis 0 here). h in (0,1) => exp is safe
    # without max-subtraction. (Would overflow for unbounded logits!)
    e = jnp.exp(h)
    denom = jnp.sum(e, axis=0, keepdims=True)                           # [1, tb]

    # linear2 with the softmax denominator folded past the matmul:
    #   out^T = (w2 @ e) * (1/denom) + b2
    num = jnp.dot(w2_ref[...], e, preferred_element_type=jnp.float32)   # [5, tb]
    out = num * pl.reciprocal(denom, approx=False) + b2_ref[...]
    ot_ref[...] = out.astype(ot_ref.dtype)


def torch_model_forward(x, w1, b1, w2, b2, *, block_b=8192, x_is_transposed=False):
    """Forward pass of TorchModel (y=None path).

    x : [B, input_size] f32 (or [input_size, B] if x_is_transposed=True)
    w1: [H, In], b1: [H], w2: [5, H], b2: [5]   (native PyTorch layouts)
    returns [B, 5] f32.
    """
    if x_is_transposed:
        In, B = x.shape
        x_t = jnp.asarray(x)
    else:
        B, In = x.shape
        x_t = jnp.asarray(x).T          # layout plumbing only (batch -> lanes)
    H = w1.shape[0]
    N_out = w2.shape[0]

    b1_2d = jnp.asarray(b1).reshape(H, 1)
    b2_2d = jnp.asarray(b2).reshape(N_out, 1)

    # Batch (lane) tile size.
    if B <= 128:
        tb = B                          # single block; full-dim lane block is legal
    else:
        # At least 2 grid steps once B exceeds one lane tile (engages v7x's
        # second TensorCore); lane tiles are multiples of 128.
        half = (((B + 1) // 2) + 127) // 128 * 128
        tb = max(128, min(block_b, half))
    grid = (pl.cdiv(B, tb),)            # ragged last block is masked by Pallas

    out_t = pl.pallas_call(
        _model_kernel,
        out_shape=jax.ShapeDtypeStruct((N_out, B), jnp.float32),
        grid_spec=pltpu.PrefetchScalarGridSpec(
            num_scalar_prefetch=0,
            grid=grid,
            in_specs=[
                pl.BlockSpec((In, tb), lambda i: (0, i)),      # x^T tile (pipelined)
                pl.BlockSpec((H, In), lambda i: (0, 0)),       # w1 resident
                pl.BlockSpec((H, 1), lambda i: (0, 0)),        # b1 resident
                pl.BlockSpec((N_out, H), lambda i: (0, 0)),    # w2 resident
                pl.BlockSpec((N_out, 1), lambda i: (0, 0)),    # b2 resident
            ],
            out_specs=pl.BlockSpec((N_out, tb), lambda i: (0, i)),
        ),
        compiler_params=pltpu.CompilerParams(
            dimension_semantics=("parallel",),
        ),
    )(x_t, jnp.asarray(w1), b1_2d, jnp.asarray(w2), b2_2d)

    return out_t.T                      # tiny [5, B] -> [B, 5]


def _reference(x, w1, b1, w2, b2):
    h = x @ w1.T + b1
    h = jax.nn.sigmoid(h)
    p = jax.nn.softmax(h, axis=1)
    return p @ w2.T + b2


if __name__ == "__main__":
    input_size = 16
    hidden_size = 32

    key = jax.random.PRNGKey(0)
    kx, kw1, kb1, kw2, kb2 = jax.random.split(key, 5)

    # Deterministic PyTorch-like uniform(-1/sqrt(fan_in), 1/sqrt(fan_in)) init.
    lim1 = 1.0 / jnp.sqrt(input_size)
    lim2 = 1.0 / jnp.sqrt(hidden_size)
    w1 = jax.random.uniform(kw1, (hidden_size, input_size), jnp.float32, -lim1, lim1)
    b1 = jax.random.uniform(kb1, (hidden_size,), jnp.float32, -lim1, lim1)
    w2 = jax.random.uniform(kw2, (5, hidden_size), jnp.float32, -lim2, lim2)
    b2 = jax.random.uniform(kb2, (5,), jnp.float32, -lim2, lim2)

    # Small batch: single grid step, lane dim = B (< 128).
    batch = 8
    x = jax.random.normal(kx, (batch, input_size), dtype=jnp.float32)
    y_pred = torch_model_forward(x, w1, b1, w2, b2)
    jax.block_until_ready(y_pred)
    ref = _reference(x, w1, b1, w2, b2)
    assert y_pred.shape == (batch, 5)
    assert jnp.allclose(y_pred, ref, atol=1e-5, rtol=1e-5)

    # Larger, non-multiple-of-128 batch: 2 grid steps + masked partial last block.
    big_batch = 300
    xb = jax.random.normal(jax.random.PRNGKey(1), (big_batch, input_size), jnp.float32)
    yb = torch_model_forward(xb, w1, b1, w2, b2)
    jax.block_until_ready(yb)
    refb = _reference(xb, w1, b1, w2, b2)
    assert yb.shape == (big_batch, 5)
    assert jnp.allclose(yb, refb, atol=1e-5, rtol=1e-5)

    # Same batch with a small tile cap (3 grid steps) and producer-provided x^T.
    yc = torch_model_forward(xb.T, w1, b1, w2, b2, block_b=128, x_is_transposed=True)
    jax.block_until_ready(yc)
    assert yc.shape == (big_batch, 5)
    assert jnp.allclose(yc, refb, atol=1e-5, rtol=1e-5)

    print("KERNEL_OK")
</pallas_src>

<mosaic_0001>
module attributes {stable_mosaic.version = 11 : i64} {
  func.func @_model_kernel(%arg0: i32, %arg1: memref<16x8xf32, #tpu.memory_space<vmem>>, %arg2: memref<32x16xf32, #tpu.memory_space<vmem>>, %arg3: memref<32x1xf32, #tpu.memory_space<vmem>>, %arg4: memref<5x32xf32, #tpu.memory_space<vmem>>, %arg5: memref<5x1xf32, #tpu.memory_space<vmem>>, %arg6: memref<5x8xf32, #tpu.memory_space<vmem>>) attributes {dimension_semantics = [#tpu.dimension_semantics<parallel>], iteration_bounds = array<i64: 1>, scalar_prefetch = 0 : i64, scratch_operands = 0 : i64, tpu.core_type = #tpu.core_type<tc>, window_params = [{transform_indices = @transform_0, window_bounds = array<i64: 16, 8>}, {pipeline_mode = #tpu.pipeline_mode<synchronous>, transform_indices = @transform_1, window_bounds = array<i64: 32, 16>}, {pipeline_mode = #tpu.pipeline_mode<synchronous>, transform_indices = @transform_2, window_bounds = array<i64: 32, 1>}, {pipeline_mode = #tpu.pipeline_mode<synchronous>, transform_indices = @transform_3, window_bounds = array<i64: 5, 32>}, {pipeline_mode = #tpu.pipeline_mode<synchronous>, transform_indices = @transform_4, window_bounds = array<i64: 5, 1>}, {transform_indices = @transform_5, window_bounds = array<i64: 5, 8>}]} {
    %c0 = arith.constant 0 : index
    %c0_0 = arith.constant 0 : index
    %0 = vector.load %arg1[%c0, %c0_0] : memref<16x8xf32, #tpu.memory_space<vmem>>, vector<16x8xf32>
    %c0_1 = arith.constant 0 : index
    %c0_2 = arith.constant 0 : index
    %1 = vector.load %arg2[%c0_1, %c0_2] : memref<32x16xf32, #tpu.memory_space<vmem>>, vector<32x16xf32>
    %cst = arith.constant dense<0.000000e+00> : vector<32x8xf32>
    %2 = tpu.matmul %1, %0, %cst {dimension_numbers = #tpu.dot_dimension_numbers<[1], [0], [0], [1], [0, 0, 1, 1], [], []>} : vector<32x16xf32>, vector<16x8xf32>, vector<32x8xf32> -> vector<32x8xf32>
    %c0_3 = arith.constant 0 : index
    %c0_4 = arith.constant 0 : index
    %3 = vector.load %arg3[%c0_3, %c0_4] : memref<32x1xf32, #tpu.memory_space<vmem>>, vector<32x1xf32>
    %4 = vector.broadcast %3 : vector<32x1xf32> to vector<32x8xf32>
    %5 = arith.addf %2, %4 : vector<32x8xf32>
    %cst_5 = arith.constant 5.000000e-01 : f32
    %6 = vector.broadcast %cst_5 : f32 to vector<32x8xf32>
    %7 = arith.mulf %6, %5 : vector<32x8xf32>
    %8 = math.tanh %7 : vector<32x8xf32>
    %cst_6 = arith.constant 5.000000e-01 : f32
    %9 = vector.broadcast %cst_6 : f32 to vector<32x8xf32>
    %10 = arith.mulf %9, %8 : vector<32x8xf32>
    %cst_7 = arith.constant 5.000000e-01 : f32
    %11 = vector.broadcast %cst_7 : f32 to vector<32x8xf32>
    %12 = arith.addf %10, %11 : vector<32x8xf32>
    %13 = math.exp %12 : vector<32x8xf32>
    %cst_8 = arith.constant dense<0.000000e+00> : vector<8xf32>
    %14 = vector.multi_reduction <add>, %13, %cst_8 [0] : vector<32x8xf32> to vector<8xf32>
    %15 = vector.shape_cast %14 : vector<8xf32> to vector<1x8xf32>
    %c0_9 = arith.constant 0 : index
    %c0_10 = arith.constant 0 : index
    %16 = vector.load %arg4[%c0_9, %c0_10] : memref<5x32xf32, #tpu.memory_space<vmem>>, vector<5x32xf32>
    %cst_11 = arith.constant dense<0.000000e+00> : vector<5x8xf32>
    %17 = tpu.matmul %16, %13, %cst_11 {dimension_numbers = #tpu.dot_dimension_numbers<[1], [0], [0], [1], [0, 0, 1, 1], [], []>} : vector<5x32xf32>, vector<32x8xf32>, vector<5x8xf32> -> vector<5x8xf32>
    %18 = tpu.reciprocal %15 : vector<1x8xf32> -> vector<1x8xf32>
    %19 = vector.broadcast %18 : vector<1x8xf32> to vector<5x8xf32>
    %20 = arith.mulf %17, %19 : vector<5x8xf32>
    %c0_12 = arith.constant 0 : index
    %c0_13 = arith.constant 0 : index
    %21 = vector.load %arg5[%c0_12, %c0_13] : memref<5x1xf32, #tpu.memory_space<vmem>>, vector<5x1xf32>
    %22 = vector.broadcast %21 : vector<5x1xf32> to vector<5x8xf32>
    %23 = arith.addf %20, %22 : vector<5x8xf32>
    %c0_14 = arith.constant 0 : index
    %c0_15 = arith.constant 0 : index
    %24 = vector.load %arg6[%c0_14, %c0_15] : memref<5x8xf32, #tpu.memory_space<vmem>>, vector<5x8xf32>
    tpu.vector_store %arg6[%c0_14, %c0_15], %23 {strides = array<i32>} : memref<5x8xf32, #tpu.memory_space<vmem>>, vector<5x8xf32>,
    return
  }
  func.func @transform_0(%arg0: i32) -> (i32, i32) {
    %c0_i32 = arith.constant 0 : i32
    %c0_i32_0 = arith.constant 0 : i32
    return %c0_i32, %arg0 : i32, i32
  }
  func.func @transform_1(%arg0: i32) -> (i32, i32) {
    %c0_i32 = arith.constant 0 : i32
    %c0_i32_0 = arith.constant 0 : i32
    %c0_i32_1 = arith.constant 0 : i32
    return %c0_i32, %c0_i32_0 : i32, i32
  }
  func.func @transform_2(%arg0: i32) -> (i32, i32) {
    %c0_i32 = arith.constant 0 : i32
    %c0_i32_0 = arith.constant 0 : i32
    %c0_i32_1 = arith.constant 0 : i32
    return %c0_i32, %c0_i32_0 : i32, i32
  }
  func.func @transform_3(%arg0: i32) -> (i32, i32) {
    %c0_i32 = arith.constant 0 : i32
    %c0_i32_0 = arith.constant 0 : i32
    %c0_i32_1 = arith.constant 0 : i32
    return %c0_i32, %c0_i32_0 : i32, i32
  }
  func.func @transform_4(%arg0: i32) -> (i32, i32) {
    %c0_i32 = arith.constant 0 : i32
    %c0_i32_0 = arith.constant 0 : i32
    %c0_i32_1 = arith.constant 0 : i32
    return %c0_i32, %c0_i32_0 : i32, i32
  }
  func.func @transform_5(%arg0: i32) -> (i32, i32) {
    %c0_i32 = arith.constant 0 : i32
    %c0_i32_0 = arith.constant 0 : i32
    return %c0_i32, %arg0 : i32, i32
  }
}

</mosaic_0001>

<llo_original>
// kernel: tpu_custom_call.1
$region0: #{tpu_custom_call.1}
  #allocation0 [shape = 'u32[]', space=smem, size = 0x4, offset = 0x4, fixed_abs, tag = 'smem constant byte address 0x4 - core index']
  #allocation1 [shape = 'u32[144,128]{1,0:T(1,128)}', space=vmem, size = 0x12000, scoped, tag = 'internal scratch']
  %s0 = inlined_call_operand.vmem [shape: f32[16,8], index: 0, kind: input, shape index: {}]
  %s1 = inlined_call_operand.vmem [shape: f32[32,16], index: 1, kind: input, shape index: {}]
  %s2 = inlined_call_operand.vmem [shape: f32[32,1], index: 2, kind: input, shape index: {}]
  %s3 = inlined_call_operand.vmem [shape: f32[5,32], index: 3, kind: input, shape index: {}]
  %s4 = inlined_call_operand.vmem [shape: f32[5,1], index: 4, kind: input, shape index: {}]
  %s5 = inlined_call_operand.hbm [shape: f32[5,8], index: 5, kind: output, shape index: {}]
  %s6 = sld [smem:[#allocation0]]
  $region30: #{tpu_custom_call.1} parent=0
    _
  %s8 = ssub.s32 1, %s6
  %s9 = scalar_select 0, %s8, %s6
  $region1: #{tpu_custom_call.1} parent=0
    #allocation2 [shape = 'u8[4096]{0}', space=vmem, size = 0x1000, scoped, tag = 'output window, operand 0, single buffered']
    #allocation3 [shape = 's32[1]{0}', space=sflag, size = 0x4, scoped, tag = 'scoped memory for tpu_custom_call.1']
    %10 = vsyncpa [#allocation3], 0
    // Predicated region
    $region2: #{tpu_custom_call.1} parent=1 // pred_check
      _
    $region3: #{tpu_custom_call.1} parent=1 // pred_check_branch
      %12 = sbr.rel (0) target = $region5
    $region4: #{tpu_custom_call.1} parent=1 // pred_region
      _
    $region5: #{tpu_custom_call.1} parent=1 // pred_fallthru
      _
    // Predicated region
    $region6: #{tpu_custom_call.1} parent=1 // pred_check
      _
    $region7: #{tpu_custom_call.1} parent=1 // pred_check_branch
      %14 = sbr.rel (0) target = $region9
    $region8: #{tpu_custom_call.1} parent=1 // pred_region
      _
    $region9: #{tpu_custom_call.1} parent=1 // pred_fallthru
      _
    // Predicated region
    $region10: #{tpu_custom_call.1} parent=1 // pred_check
      _
    $region11: #{tpu_custom_call.1} parent=1 // pred_check_branch
      %16 = sbr.rel (0) target = $region13
    $region12: #{tpu_custom_call.1} parent=1 // pred_region
      _
    $region13: #{tpu_custom_call.1} parent=1 // pred_fallthru
      _
    // Predicated region
    $region14: #{tpu_custom_call.1} parent=1 // pred_check
      _
    $region15: #{tpu_custom_call.1} parent=1 // pred_check_branch
      %18 = sbr.rel (0) target = $region17
    $region16: #{tpu_custom_call.1} parent=1 // pred_region
      _
    $region17: #{tpu_custom_call.1} parent=1 // pred_fallthru
      _
    // Predicated region
    $region18: #{tpu_custom_call.1} parent=1 // pred_check
      _
    $region19: #{tpu_custom_call.1} parent=1 // pred_check_branch
      %20 = sbr.rel (0) target = $region21
    $region20: #{tpu_custom_call.1} parent=1 // pred_region
      _
    $region21: #{tpu_custom_call.1} parent=1 // pred_fallthru
      _
    %v21 = vld [vmem:[%s0] sm:$0xff]
    %v22 = vld [vmem:[%s0 + $0x8] sm:$0xff]
    %v23 = vld [vmem:[%s1] sm:$0xff]
    %v24 = vld [vmem:[%s1 + $0x8] sm:$0xff]
    %v25 = vld [vmem:[%s1 + $0x10] sm:$0xff]
    %v26 = vld [vmem:[%s1 + $0x18] sm:$0xff]
    %v27 = vld [vmem:[%s2] sm:$0xff]
    %v28 = vld [vmem:[%s2 + $0x8] sm:$0xff]
    %v29 = vld [vmem:[%s2 + $0x10] sm:$0xff]
    %v30 = vld [vmem:[%s2 + $0x18] sm:$0xff]
    %32 = vset.pattern.permute.xlu0 0
    %33 = vperm.xlu0 %32, %v27
    %v34 = vpop.permute.xlu0 %33
    %37 = vset.pattern.permute.xlu0 0
    %38 = vperm.xlu0 %37, %v28
    %v39 = vpop.permute.xlu0 %38
    %42 = vset.pattern.permute.xlu0 0
    %43 = vperm.xlu0 %42, %v29
    %v44 = vpop.permute.xlu0 %43
    %47 = vset.pattern.permute.xlu0 0
    %48 = vperm.xlu0 %47, %v30
    %v49 = vpop.permute.xlu0 %48
    %vm51 = vcmask 130048
    %v53 = vsel %vm51, %v23, 0
    %v56 = vsel %vm51, %v24, 0
    %v59 = vsel %vm51, %v25, 0
    %v62 = vsel %vm51, %v26, 0
    %64 = vmatprep.subr.mxu0 0.0
    %65 = vmatpush1.msra.mxu0 %v21
    %66 = vmatprep.subr.mxu0 0.0
    %67 = vmatpush1.msra.mxu0 %v22
    %68 = vmatprep.subr.mxu0 0.0
    %69 = vmatpush1.msra.mxu0 0.0
    %70 = vmatprep.subr.mxu0 0.0
    %71 = vmatpush1.msra.mxu0 0.0
    %72 = vmatprep.subr.mxu0 0.0
    %73 = vmatpush1.msra.mxu0 0.0
    %74 = vmatprep.subr.mxu0 0.0
    %75 = vmatpush1.msra.mxu0 0.0
    %76 = vmatprep.subr.mxu0 0.0
    %77 = vmatpush1.msra.mxu0 0.0
    %78 = vmatprep.subr.mxu0 0.0
    %79 = vmatpush1.msra.mxu0 0.0
    %80 = vmatprep.subr.mxu0 0.0
    %81 = vmatpush1.msra.mxu0 0.0
    %82 = vmatprep.subr.mxu0 0.0
    %83 = vmatpush1.msra.mxu0 0.0
    %84 = vmatprep.subr.mxu0 0.0
    %85 = vmatpush1.msra.mxu0 0.0
    %86 = vmatprep.subr.mxu0 0.0
    %87 = vmatpush1.msra.mxu0 0.0
    %88 = vmatprep.subr.mxu0 0.0
    %89 = vmatpush1.msra.mxu0 0.0
    %90 = vmatprep.subr.mxu0 0.0
    %91 = vmatpush1.msra.mxu0 0.0
    %92 = vmatprep.subr.mxu0 0.0
    %93 = vmatpush1.msra.mxu0 0.0
    %94 = vmatprep.subr.mxu0 0.0
    %95 = vmatpush1.msra.mxu0 0.0
    %96 = vmatprep.subr.mxu0 0.0
    %97 = vmatpush1.msra.mxu0 0.0
    %98 = vmatprep.subr.mxu0 0.0
    %99 = vmatpush1.msra.mxu0 0.0
    %100 = vmatprep.subr.mxu0 0.0
    %101 = vmatpush1.msra.mxu0 0.0
    %102 = vmatprep.subr.mxu0 0.0
    %103 = vmatpush1.msra.mxu0 0.0
    %104 = vmatprep.subr.mxu0 0.0
    %105 = vmatpush1.msra.mxu0 0.0
    %106 = vmatprep.subr.mxu0 0.0
    %107 = vmatpush1.msra.mxu0 0.0
    %108 = vmatprep.subr.mxu0 0.0
    %109 = vmatpush1.msra.mxu0 0.0
    %110 = vmatprep.subr.mxu0 0.0
    %111 = vmatpush1.msra.mxu0 0.0
    %112 = vmatprep.subr.mxu0 0.0
    %113 = vmatpush1.msra.mxu0 0.0
    %114 = vmatprep.subr.mxu0 0.0
    %115 = vmatpush1.msra.mxu0 0.0
    %116 = vmatprep.subr.mxu0 0.0
    %117 = vmatpush1.msra.mxu0 0.0
    %118 = vmatprep.subr.mxu0 0.0
    %119 = vmatpush1.msra.mxu0 0.0
    %120 = vmatprep.subr.mxu0 0.0
    %121 = vmatpush1.msra.mxu0 0.0
    %122 = vmatprep.subr.mxu0 0.0
    %123 = vmatpush1.msra.mxu0 0.0
    %124 = vmatprep.subr.mxu0 0.0
    %125 = vmatpush1.msra.mxu0 0.0
    %126 = vmatprep.subr.mxu0 0.0
    %127 = vmatpush1.msra.mxu0 0.0
    %128 = vmatprep.mubr.f32.mxu0 0.0
    %129 = vmatmul.mubr.f32.gmra.mrb[0].mxu0 %v53
    %v130 = vpop.f32.mrb[0].mxu0
    %v131 = vadd.f32 %v34, %v130
    %v132 = vpop.f32.mrb[0].mxu0
    %133 = vmatprep.mubr.f32.mxu0 0.0
    %134 = vmatmul.mubr.f32.gmra.mrb[0].mxu0 %v56
    %v135 = vpop.f32.mrb[0].mxu0
    %v136 = vadd.f32 %v39, %v135
    %v137 = vpop.f32.mrb[0].mxu0
    %138 = vmatprep.mubr.f32.mxu0 0.0
    %139 = vmatmul.mubr.f32.gmra.mrb[0].mxu0 %v59
    %v140 = vpop.f32.mrb[0].mxu0
    %v141 = vadd.f32 %v44, %v140
    %v142 = vpop.f32.mrb[0].mxu0
    %143 = vmatprep.mubr.f32.mxu0 0.0
    %144 = vmatmul.mubr.f32.gmra.mrb[0].mxu0 %v62
    %v145 = vpop.f32.mrb[0].mxu0
    %v146 = vadd.f32 %v49, %v145
    %v147 = vpop.f32.mrb[0].mxu0
    %148 = vdwg.mxu0
    %v149 = vmul.f32 %v131, 0.5
    %v150 = vmul.f32 %v136, 0.5
    %v151 = vmul.f32 %v141, 0.5
    %v152 = vmul.f32 %v146, 0.5
    %v153 = vtanh.pop %v149
    %v154 = vtanh.pop %v150
    %v155 = vtanh.pop %v151
    %v156 = vtanh.pop %v152
    %v157 = vmul.f32 %v153, 0.5
    %v158 = vmul.f32 %v154, 0.5
    %v159 = vmul.f32 %v155, 0.5
    %v160 = vmul.f32 %v156, 0.5
    %v161 = vadd.f32 %v157, 0.5
    %v162 = vadd.f32 %v158, 0.5
    %v163 = vadd.f32 %v159, 0.5
    %v164 = vadd.f32 %v160, 0.5
    %v165 = vmul.f32 %v161, 1.442695
    %v166 = vpow.pop %v165
    %v167 = vmul.f32 %v162, 1.442695
    %v168 = vpow.pop %v167
    %v169 = vmul.f32 %v163, 1.442695
    %v170 = vpow.pop %v169
    %v171 = vmul.f32 %v164, 1.442695
    %v172 = vpow.pop %v171
    %vm173 = vcmask 64512
    %v174 = vsel %vm173, %v166, 0.0
    %v175 = vsel %vm173, %v168, 0.0
    %v176 = vadd.f32 %v174, %v175
    %v177 = vsel %vm173, %v170, 0.0
    %v178 = vadd.f32 %v176, %v177
    %v179 = vsel %vm173, %v172, 0.0
    %v180 = vadd.f32 %v178, %v179
    %v181 = vrot.slane %v180, 4
    %v182 = vadd.f32 %v180, %v181
    %v183 = vrot.slane %v182, 2
    %v184 = vadd.f32 %v182, %v183
    %v185 = vrot.slane %v184, 1
    %v186 = vadd.f32 %v184, %v185
    %v187 = vld [vmem:[%s3] sm:$0x1f]
    %vm188 = vcmask 261120
    %v190 = vsel %vm188, %v187, 0
    %192 = vmatprep.subr.mxu0 0.0
    %193 = vmatpush1.msra.mxu0 %v166
    %194 = vmatprep.subr.mxu0 0.0
    %195 = vmatpush1.msra.mxu0 %v168
    %196 = vmatprep.subr.mxu0 0.0
    %197 = vmatpush1.msra.mxu0 %v170
    %198 = vmatprep.subr.mxu0 0.0
    %199 = vmatpush1.msra.mxu0 %v172
    %200 = vmatprep.subr.mxu0 0.0
    %201 = vmatpush1.msra.mxu0 0.0
    %202 = vmatprep.subr.mxu0 0.0
    %203 = vmatpush1.msra.mxu0 0.0
    %204 = vmatprep.subr.mxu0 0.0
    %205 = vmatpush1.msra.mxu0 0.0
    %206 = vmatprep.subr.mxu0 0.0
    %207 = vmatpush1.msra.mxu0 0.0
    %208 = vmatprep.subr.mxu0 0.0
    %209 = vmatpush1.msra.mxu0 0.0
    %210 = vmatprep.subr.mxu0 0.0
    %211 = vmatpush1.msra.mxu0 0.0
    %212 = vmatprep.subr.mxu0 0.0
    %213 = vmatpush1.msra.mxu0 0.0
    %214 = vmatprep.subr.mxu0 0.0
    %215 = vmatpush1.msra.mxu0 0.0
    %216 = vmatprep.subr.mxu0 0.0
    %217 = vmatpush1.msra.mxu0 0.0
    %218 = vmatprep.subr.mxu0 0.0
    %219 = vmatpush1.msra.mxu0 0.0
    %220 = vmatprep.subr.mxu0 0.0
    %221 = vmatpush1.msra.mxu0 0.0
    %222 = vmatprep.subr.mxu0 0.0
    %223 = vmatpush1.msra.mxu0 0.0
    %224 = vmatprep.subr.mxu0 0.0
    %225 = vmatpush1.msra.mxu0 0.0
    %226 = vmatprep.subr.mxu0 0.0
    %227 = vmatpush1.msra.mxu0 0.0
    %228 = vmatprep.subr.mxu0 0.0
    %229 = vmatpush1.msra.mxu0 0.0
    %230 = vmatprep.subr.mxu0 0.0
    %231 = vmatpush1.msra.mxu0 0.0
    %232 = vmatprep.subr.mxu0 0.0
    %233 = vmatpush1.msra.mxu0 0.0
    %234 = vmatprep.subr.mxu0 0.0
    %235 = vmatpush1.msra.mxu0 0.0
    %236 = vmatprep.subr.mxu0 0.0
    %237 = vmatpush1.msra.mxu0 0.0
    %238 = vmatprep.subr.mxu0 0.0
    %239 = vmatpush1.msra.mxu0 0.0
    %240 = vmatprep.subr.mxu0 0.0
    %241 = vmatpush1.msra.mxu0 0.0
    %242 = vmatprep.subr.mxu0 0.0
    %243 = vmatpush1.msra.mxu0 0.0
    %244 = vmatprep.subr.mxu0 0.0
    %245 = vmatpush1.msra.mxu0 0.0
    %246 = vmatprep.subr.mxu0 0.0
    %247 = vmatpush1.msra.mxu0 0.0
    %248 = vmatprep.subr.mxu0 0.0
    %249 = vmatpush1.msra.mxu0 0.0
    %250 = vmatprep.subr.mxu0 0.0
    %251 = vmatpush1.msra.mxu0 0.0
    %252 = vmatprep.subr.mxu0 0.0
    %253 = vmatpush1.msra.mxu0 0.0
    %254 = vmatprep.subr.mxu0 0.0
    %255 = vmatpush1.msra.mxu0 0.0
    %256 = vmatprep.mubr.f32.mxu0 0.0
    %257 = vmatmul.mubr.f32.gmra.mrb[0].mxu0 %v190
    %v258 = vpop.f32.mrb[0].mxu0
    %v259 = vadd.f32 0.0, %v258
    %v260 = vpop.f32.mrb[0].mxu0
    %261 = vdwg.mxu0
    %v262 = vrcp.pop %v186
    %v263 = vmul.f32 %v259, %v262
    %v264 = vld [vmem:[%s4] sm:$0x1f]
    %266 = vset.pattern.permute.xlu0 0
    %267 = vperm.xlu0 %266, %v264
    %v268 = vpop.permute.xlu0 %267
    %v270 = vadd.f32 %v263, %v268
    %vm271 = vcmask 61440
    %272 = vst.msk [vmem:[#allocation2] sm:$0x1f] %vm271, %v270
    // Predicated region
    $region22: #{tpu_custom_call.1} parent=1 // pred_check
      _
    $region23: #{tpu_custom_call.1} parent=1 // pred_check_branch
      %274 = sbr.rel (0) target = $region25
    $region24: #{tpu_custom_call.1} parent=1 // pred_region
      %s276 = ssub.s32 128, 128
      %277 = vsyncadd [#allocation3], %s276
      %s279 = sshll.u32 [#allocation2], 4
      %s280 = int_to_ptr.vmem [resolvable:$true] %s279
      %282 = dma.vmem_to_hbm [thread:$0]  %s280, 128, %s5, [#allocation3]
    $region25: #{tpu_custom_call.1} parent=1 // pred_fallthru
      _
    // Predicated region
    $region26: #{tpu_custom_call.1} parent=1 // pred_check
      _
    $region27: #{tpu_custom_call.1} parent=1 // pred_check_branch
      %284 = sbr.rel (0) target = $region29
    $region28: #{tpu_custom_call.1} parent=1 // pred_region
      %285 = dma.done [#allocation3], 128
    $region29: #{tpu_custom_call.1} parent=1 // pred_fallthru
      _
    %286 = vsyncpa [#allocation3], 1

</llo_original>
